<compile_context>
chip_gen: v5e
topology: v5e:2x2
jax: 0.10.0
libtpu: 0.0.40
codegen_flags: <defaults>
</compile_context>

<pallas_src>
import functools
import math

import jax
import jax.numpy as jnp
from jax.experimental import pallas as pl
from jax.experimental.pallas import tpu as pltpu

_INV_SQRT2 = 1.0 / math.sqrt(2.0)


# ----------------------------------------------------------------------------
# Small generic kernels (embedding projection / embedding LN / pooler)
# ----------------------------------------------------------------------------
def _linear_kernel(x_ref, w_ref, b_ref, o_ref, *, act):
    # x: [N, Din] f32, w: [Din, Dout] bf16, b: [1, Dout] f32
    x = x_ref[...].astype(jnp.bfloat16)
    y = jnp.dot(x, w_ref[...], preferred_element_type=jnp.float32) + b_ref[...]
    if act == "gelu":
        y = 0.5 * y * (1.0 + jax.lax.erf(y * _INV_SQRT2))
    elif act == "tanh":
        y = jnp.tanh(y)
    o_ref[...] = y.astype(o_ref.dtype)


def linear(x, w_bf16, b_2d, act="none"):
    """y = x @ w + b (optional GELU / tanh); bf16 matmul, f32 accumulation."""
    N, Din = x.shape
    Dout = w_bf16.shape[1]
    kernel = functools.partial(_linear_kernel, act=act)
    return pl.pallas_call(
        kernel,
        out_shape=jax.ShapeDtypeStruct((N, Dout), jnp.float32),
        grid=(1,),
        in_specs=[
            pl.BlockSpec((N, Din), lambda i: (0, 0)),
            pl.BlockSpec((Din, Dout), lambda i: (0, 0)),
            pl.BlockSpec((1, Dout), lambda i: (0, 0)),
        ],
        out_specs=pl.BlockSpec((N, Dout), lambda i: (0, 0)),
    )(x, w_bf16, b_2d)


def _layernorm_kernel(x_ref, g_ref, b_ref, o_ref, *, eps):
    x = x_ref[...]
    mu = jnp.mean(x, axis=-1, keepdims=True)
    var = jnp.mean((x - mu) * (x - mu), axis=-1, keepdims=True)
    y = (x - mu) * jax.lax.rsqrt(var + eps)
    o_ref[...] = (y * g_ref[...] + b_ref[...]).astype(o_ref.dtype)


def layernorm(x, gamma_2d, beta_2d, eps=1e-12):
    N, H = x.shape
    kernel = functools.partial(_layernorm_kernel, eps=eps)
    return pl.pallas_call(
        kernel,
        out_shape=jax.ShapeDtypeStruct((N, H), jnp.float32),
        grid=(1,),
        in_specs=[
            pl.BlockSpec((N, H), lambda i: (0, 0)),
            pl.BlockSpec((1, H), lambda i: (0, 0)),
            pl.BlockSpec((1, H), lambda i: (0, 0)),
        ],
        out_specs=pl.BlockSpec((N, H), lambda i: (0, 0)),
    )(x, gamma_2d, beta_2d)


# ----------------------------------------------------------------------------
# Fused BERT layer kernel: one pallas_call per layer, one grid step per batch
# ----------------------------------------------------------------------------
def _ln_inline(y, g, b, eps):
    mu = jnp.mean(y, axis=-1, keepdims=True)
    var = jnp.mean((y - mu) * (y - mu), axis=-1, keepdims=True)
    return (y - mu) * jax.lax.rsqrt(var + eps) * g + b


def _bert_layer_kernel(x_ref, mask_ref,
                       wqkv_ref, bqkv_ref, wo_ref, bo_ref, ln1g_ref, ln1b_ref,
                       wi_ref, bi_ref, wo2_ref, bo2_ref, ln2g_ref, ln2b_ref,
                       o_ref, *, nH, dH, eps):
    H = nH * dH
    T = x_ref.shape[1]

    x = x_ref[...].reshape(T, H)                        # f32 residual stream
    xb = x.astype(jnp.bfloat16)

    # ---- fused QKV projection (scale already folded into the Q columns) ----
    qkv = jnp.dot(xb, wqkv_ref[...], preferred_element_type=jnp.float32)
    qkv = qkv + bqkv_ref[...]                           # [T, 3H] f32

    # ---- attention over all heads (static unrolled per-head 2-D matmuls) ----
    m2 = mask_ref[...].reshape(1, T)                    # additive mask, f32
    ctx_heads = []
    for h in range(nH):
        qh = qkv[:, h * dH:(h + 1) * dH].astype(jnp.bfloat16)
        kh = qkv[:, H + h * dH:H + (h + 1) * dH].astype(jnp.bfloat16)
        vh = qkv[:, 2 * H + h * dH:2 * H + (h + 1) * dH].astype(jnp.bfloat16)
        s = jnp.dot(qh, kh.T, preferred_element_type=jnp.float32) + m2
        s = s - jnp.max(s, axis=-1, keepdims=True)
        p = jnp.exp(s)
        p = p * pl.reciprocal(jnp.sum(p, axis=-1, keepdims=True), approx=True)
        ctx_heads.append(
            jnp.dot(p.astype(jnp.bfloat16), vh, preferred_element_type=jnp.float32))
    ctx = jnp.concatenate(ctx_heads, axis=-1)           # [T, H] f32

    # ---- output projection + residual + LayerNorm ----
    attn_out = jnp.dot(ctx.astype(jnp.bfloat16), wo_ref[...],
                       preferred_element_type=jnp.float32) + bo_ref[...]
    h1 = _ln_inline(attn_out + x, ln1g_ref[...], ln1b_ref[...], eps)

    # ---- FFN (GELU intermediate stays in VMEM) + residual + LayerNorm ----
    inter = jnp.dot(h1.astype(jnp.bfloat16), wi_ref[...],
                    preferred_element_type=jnp.float32) + bi_ref[...]
    inter = 0.5 * inter * (1.0 + jax.lax.erf(inter * _INV_SQRT2))
    ffn = jnp.dot(inter.astype(jnp.bfloat16), wo2_ref[...],
                  preferred_element_type=jnp.float32) + bo2_ref[...]
    out = _ln_inline(ffn + h1, ln2g_ref[...], ln2b_ref[...], eps)

    o_ref[...] = out.reshape(1, T, H).astype(o_ref.dtype)


def bert_layer(x, add_mask, lp, *, nH, dH, eps=1e-12):
    """One full BERT layer. x: [B, T, H] f32, add_mask: [B, 1, T] f32."""
    B, T, H = x.shape
    kernel = functools.partial(_bert_layer_kernel, nH=nH, dH=dH, eps=eps)

    def full2d(a):
        return pl.BlockSpec(a.shape, lambda b: (0, 0))

    return pl.pallas_call(
        kernel,
        out_shape=jax.ShapeDtypeStruct((B, T, H), jnp.float32),
        grid=(B,),
        in_specs=[
            pl.BlockSpec((1, T, H), lambda b: (b, 0, 0)),
            pl.BlockSpec((1, 1, T), lambda b: (b, 0, 0)),
            full2d(lp["wqkv"]), full2d(lp["bqkv"]),
            full2d(lp["wo"]), full2d(lp["bo"]),
            full2d(lp["ln1_g"]), full2d(lp["ln1_b"]),
            full2d(lp["wi"]), full2d(lp["bi"]),
            full2d(lp["wo2"]), full2d(lp["bo2"]),
            full2d(lp["ln2_g"]), full2d(lp["ln2_b"]),
        ],
        out_specs=pl.BlockSpec((1, T, H), lambda b: (b, 0, 0)),
        compiler_params=pltpu.CompilerParams(dimension_semantics=("parallel",)),
    )(x, add_mask,
      lp["wqkv"], lp["bqkv"], lp["wo"], lp["bo"], lp["ln1_g"], lp["ln1_b"],
      lp["wi"], lp["bi"], lp["wo2"], lp["bo2"], lp["ln2_g"], lp["ln2_b"])


# ----------------------------------------------------------------------------
# Parameter preprocessing: fuse QKV, fold attention scale, cast weights to bf16
# ----------------------------------------------------------------------------
def prepare_visual_bert_params(raw, cfg):
    H = cfg["hidden_size"]
    nH = cfg["num_attention_heads"]
    dH = H // nH
    scale = 1.0 / math.sqrt(dH)

    def row(v):
        return v.reshape(1, -1).astype(jnp.float32)

    p = {
        "word_emb": raw["word_emb"],
        "pos_emb": raw["pos_emb"],
        "type_emb": raw["type_emb"],
        "vis_proj_w": raw["vis_proj_w"].astype(jnp.bfloat16),
        "vis_proj_b": row(raw["vis_proj_b"]),
        "emb_ln_g": row(raw["emb_ln_g"]),
        "emb_ln_b": row(raw["emb_ln_b"]),
        "pool_w": raw["pool_w"].astype(jnp.bfloat16),
        "pool_b": row(raw["pool_b"]),
        "layers": [],
    }
    for lyr in raw["layers"]:
        wqkv = jnp.concatenate([lyr["q_w"] * scale, lyr["k_w"], lyr["v_w"]], axis=1)
        bqkv = jnp.concatenate([lyr["q_b"] * scale, lyr["k_b"], lyr["v_b"]], axis=0)
        p["layers"].append({
            "wqkv": wqkv.astype(jnp.bfloat16),
            "bqkv": row(bqkv),
            "wo": lyr["o_w"].astype(jnp.bfloat16),
            "bo": row(lyr["o_b"]),
            "ln1_g": row(lyr["attn_ln_g"]),
            "ln1_b": row(lyr["attn_ln_b"]),
            "wi": lyr["i_w"].astype(jnp.bfloat16),
            "bi": row(lyr["i_b"]),
            "wo2": lyr["out_w"].astype(jnp.bfloat16),
            "bo2": row(lyr["out_b"]),
            "ln2_g": row(lyr["out_ln_g"]),
            "ln2_b": row(lyr["out_ln_b"]),
        })
    return p


# ----------------------------------------------------------------------------
# VisualBertModel forward (embeddings -> encoder layers -> pooler), eval mode
# ----------------------------------------------------------------------------
def visual_bert_forward(params, cfg, input_ids, attn_mask, token_type_ids,
                        visual_embeds, visual_attn_mask, visual_token_type_ids):
    H = cfg["hidden_size"]
    nH = cfg["num_attention_heads"]
    dH = H // nH
    B, Tt = input_ids.shape
    Tv = visual_embeds.shape[1]
    T = Tt + Tv

    # ---- embeddings (table gathers are plain-JAX glue; projection is Pallas) ----
    word_e = params["word_emb"][input_ids]                       # [B, Tt, H]
    pos_e = params["pos_emb"][jnp.arange(Tt)][None, :, :]        # [1, Tt, H]
    type_e = params["type_emb"][token_type_ids]                  # [B, Tt, H]
    text_emb = word_e + pos_e + type_e

    v_proj = linear(visual_embeds.reshape(B * Tv, -1),
                    params["vis_proj_w"], params["vis_proj_b"]).reshape(B, Tv, H)
    v_type = params["type_emb"][visual_token_type_ids]           # [B, Tv, H]
    v_pos = params["pos_emb"][0][None, None, :]                  # visual position ids = 0
    vis_emb = v_proj + v_pos + v_type

    emb = jnp.concatenate([text_emb, vis_emb], axis=1)           # [B, T, H]
    emb = layernorm(emb.reshape(B * T, H),
                    params["emb_ln_g"], params["emb_ln_b"]).reshape(B, T, H)
    # (dropout is identity in eval mode)

    mask = jnp.concatenate([attn_mask, visual_attn_mask], axis=1).astype(jnp.float32)
    add_mask = ((1.0 - mask) * -10000.0)[:, None, :]             # [B, 1, T]

    x = emb
    for lp in params["layers"]:
        x = bert_layer(x, add_mask, lp, nH=nH, dH=dH)            # one fused kernel/layer

    last_hidden = x                                              # [B, T, H]
    cls = last_hidden[:, 0, :]                                   # [B, H]
    pooled = linear(cls, params["pool_w"], params["pool_b"], act="tanh")
    return last_hidden, pooled


# ----------------------------------------------------------------------------
# AQVSR_Bert forward: two independent VisualBert encoders (query + ctx)
# ----------------------------------------------------------------------------
def aqvsr_bert_forward(query_params, ctx_params, cfg, query_inputs, ctx_inputs,
                       return_embedding=True):
    q_last, q_pool = visual_bert_forward(query_params, cfg, *query_inputs)
    c_last, c_pool = visual_bert_forward(ctx_params, cfg, *ctx_inputs)
    if return_embedding:
        return q_last[:, 0, :], c_last[:, 0, :]
    return (q_last, q_pool), (c_last, c_pool)


# ----------------------------------------------------------------------------
# Deterministic synthetic parameter init (shapes follow BertConfig-style cfg)
# ----------------------------------------------------------------------------
def init_visual_bert_params(key, cfg):
    H = cfg["hidden_size"]
    I = cfg["intermediate_size"]
    V = cfg["vocab_size"]
    P = cfg["max_position_embeddings"]
    TT = cfg["type_vocab_size"]
    VD = cfg["visual_embedding_dim"]
    L = cfg["num_hidden_layers"]

    keys = iter(jax.random.split(key, 16 + 16 * L))

    def nrm(shape):
        return 0.02 * jax.random.normal(next(keys), shape, jnp.float32)

    params = {
        "word_emb": nrm((V, H)),
        "pos_emb": nrm((P, H)),
        "type_emb": nrm((TT, H)),
        "vis_proj_w": nrm((VD, H)),
        "vis_proj_b": jnp.zeros((H,), jnp.float32),
        "emb_ln_g": jnp.ones((H,), jnp.float32),
        "emb_ln_b": jnp.zeros((H,), jnp.float32),
        "pool_w": nrm((H, H)),
        "pool_b": jnp.zeros((H,), jnp.float32),
        "layers": [],
    }
    for _ in range(L):
        params["layers"].append({
            "q_w": nrm((H, H)), "q_b": jnp.zeros((H,), jnp.float32),
            "k_w": nrm((H, H)), "k_b": jnp.zeros((H,), jnp.float32),
            "v_w": nrm((H, H)), "v_b": jnp.zeros((H,), jnp.float32),
            "o_w": nrm((H, H)), "o_b": jnp.zeros((H,), jnp.float32),
            "attn_ln_g": jnp.ones((H,), jnp.float32),
            "attn_ln_b": jnp.zeros((H,), jnp.float32),
            "i_w": nrm((H, I)), "i_b": jnp.zeros((I,), jnp.float32),
            "out_w": nrm((I, H)), "out_b": jnp.zeros((H,), jnp.float32),
            "out_ln_g": jnp.ones((H,), jnp.float32),
            "out_ln_b": jnp.zeros((H,), jnp.float32),
        })
    return params


# ----------------------------------------------------------------------------
# Main
# ----------------------------------------------------------------------------
if __name__ == "__main__":
    cfg = {
        "vocab_size": 100,
        "hidden_size": 32,
        "num_hidden_layers": 2,
        "num_attention_heads": 2,
        "intermediate_size": 64,
        "max_position_embeddings": 64,
        "type_vocab_size": 2,
        "visual_embedding_dim": 48,
    }

    key = jax.random.PRNGKey(0)
    k_qp, k_cp, k_in = jax.random.split(key, 3)
    query_params = prepare_visual_bert_params(init_visual_bert_params(k_qp, cfg), cfg)
    ctx_params = prepare_visual_bert_params(init_visual_bert_params(k_cp, cfg), cfg)

    B, Tt, Tv = 2, 8, 4
    k1, k2, k3, k4 = jax.random.split(k_in, 4)

    def make_inputs(k_ids, k_vis):
        input_ids = jax.random.randint(k_ids, (B, Tt), 0, cfg["vocab_size"], dtype=jnp.int32)
        attn_mask = jnp.ones((B, Tt), jnp.float32)
        token_type_ids = jnp.zeros((B, Tt), jnp.int32)
        visual_embeds = jax.random.normal(k_vis, (B, Tv, cfg["visual_embedding_dim"]), jnp.float32)
        visual_attn_mask = jnp.ones((B, Tv), jnp.float32)
        visual_token_type_ids = jnp.ones((B, Tv), jnp.int32)
        return (input_ids, attn_mask, token_type_ids,
                visual_embeds, visual_attn_mask, visual_token_type_ids)

    query_inputs = make_inputs(k1, k2)
    ctx_inputs = make_inputs(k3, k4)

    q_emb, c_emb = aqvsr_bert_forward(query_params, ctx_params, cfg,
                                      query_inputs, ctx_inputs,
                                      return_embedding=True)
    jax.block_until_ready((q_emb, c_emb))

    assert q_emb.shape == (B, cfg["hidden_size"])
    assert c_emb.shape == (B, cfg["hidden_size"])
    assert bool(jnp.all(jnp.isfinite(q_emb))) and bool(jnp.all(jnp.isfinite(c_emb)))
    print("KERNEL_OK")
</pallas_src>

<mosaic_0001>
module attributes {stable_mosaic.version = 11 : i64} {
  func.func @_linear_kernel(%arg0: i32, %arg1: memref<8x48xf32, #tpu.memory_space<vmem>>, %arg2: memref<48x32xbf16, #tpu.memory_space<vmem>>, %arg3: memref<1x32xf32, #tpu.memory_space<vmem>>, %arg4: memref<8x32xf32, #tpu.memory_space<vmem>>) attributes {dimension_semantics = [#tpu.dimension_semantics<arbitrary>], iteration_bounds = array<i64: 1>, scalar_prefetch = 0 : i64, scratch_operands = 0 : i64, tpu.core_type = #tpu.core_type<tc>, window_params = [{pipeline_mode = #tpu.pipeline_mode<synchronous>, transform_indices = @transform_0, window_bounds = array<i64: 8, 48>}, {pipeline_mode = #tpu.pipeline_mode<synchronous>, transform_indices = @transform_1, window_bounds = array<i64: 48, 32>}, {pipeline_mode = #tpu.pipeline_mode<synchronous>, transform_indices = @transform_2, window_bounds = array<i64: 1, 32>}, {pipeline_mode = #tpu.pipeline_mode<synchronous>, transform_indices = @transform_3, window_bounds = array<i64: 8, 32>}]} {
    %c0 = arith.constant 0 : index
    %c0_0 = arith.constant 0 : index
    %0 = vector.load %arg1[%c0, %c0_0] : memref<8x48xf32, #tpu.memory_space<vmem>>, vector<8x48xf32>
    %1 = arith.truncf %0 : vector<8x48xf32> to vector<8x48xbf16>
    %c0_1 = arith.constant 0 : index
    %c0_2 = arith.constant 0 : index
    %2 = vector.load %arg2[%c0_1, %c0_2] : memref<48x32xbf16, #tpu.memory_space<vmem>>, vector<48x32xbf16>
    %cst = arith.constant dense<0.000000e+00> : vector<8x32xf32>
    %3 = tpu.matmul %1, %2, %cst {dimension_numbers = #tpu.dot_dimension_numbers<[1], [0], [0], [1], [0, 0, 1, 1], [], []>} : vector<8x48xbf16>, vector<48x32xbf16>, vector<8x32xf32> -> vector<8x32xf32>
    %c0_3 = arith.constant 0 : index
    %c0_4 = arith.constant 0 : index
    %4 = vector.load %arg3[%c0_3, %c0_4] : memref<1x32xf32, #tpu.memory_space<vmem>>, vector<1x32xf32>
    %5 = vector.broadcast %4 : vector<1x32xf32> to vector<8x32xf32>
    %6 = arith.addf %3, %5 : vector<8x32xf32>
    %c0_5 = arith.constant 0 : index
    %c0_6 = arith.constant 0 : index
    %7 = vector.load %arg4[%c0_5, %c0_6] : memref<8x32xf32, #tpu.memory_space<vmem>>, vector<8x32xf32>
    tpu.vector_store %arg4[%c0_5, %c0_6], %6 {strides = array<i32>} : memref<8x32xf32, #tpu.memory_space<vmem>>, vector<8x32xf32>,
    return
  }
  func.func @transform_0(%arg0: i32) -> (i32, i32) {
    %c0_i32 = arith.constant 0 : i32
    %c0_i32_0 = arith.constant 0 : i32
    %c0_i32_1 = arith.constant 0 : i32
    return %c0_i32, %c0_i32_0 : i32, i32
  }
  func.func @transform_1(%arg0: i32) -> (i32, i32) {
    %c0_i32 = arith.constant 0 : i32
    %c0_i32_0 = arith.constant 0 : i32
    %c0_i32_1 = arith.constant 0 : i32
    return %c0_i32, %c0_i32_0 : i32, i32
  }
  func.func @transform_2(%arg0: i32) -> (i32, i32) {
    %c0_i32 = arith.constant 0 : i32
    %c0_i32_0 = arith.constant 0 : i32
    %c0_i32_1 = arith.constant 0 : i32
    return %c0_i32, %c0_i32_0 : i32, i32
  }
  func.func @transform_3(%arg0: i32) -> (i32, i32) {
    %c0_i32 = arith.constant 0 : i32
    %c0_i32_0 = arith.constant 0 : i32
    %c0_i32_1 = arith.constant 0 : i32
    return %c0_i32, %c0_i32_0 : i32, i32
  }
}

</mosaic_0001>

<llo_original>
// kernel: tpu_custom_call.1
$region0: #{tpu_custom_call.1}
  #allocation0 [shape = 'u32[]', space=smem, size = 0x4, offset = 0x4, fixed_abs, tag = 'smem constant byte address 0x4 - core index']
  #allocation1 [shape = 'u32[72,128]{1,0:T(1,128)}', space=vmem, size = 0x9000, scoped, tag = 'internal scratch']
  %s0 = inlined_call_operand.vmem [shape: f32[8,48], index: 0, kind: input, shape index: {}]
  %s1 = inlined_call_operand.vmem [shape: bf16[48,32], index: 1, kind: input, shape index: {}]
  %s2 = inlined_call_operand.vmem [shape: f32[1,32], index: 2, kind: input, shape index: {}]
  %s3 = inlined_call_operand.hbm [shape: f32[8,32], index: 3, kind: output, shape index: {}]
  %s4 = sld [smem:[#allocation0]]
  $region22: #{tpu_custom_call.1} parent=0
    _
  %s6 = ssub.s32 1, %s4
  %s7 = scalar_select 0, %s6, %s4
  $region1: #{tpu_custom_call.1} parent=0
    #allocation2 [shape = 'u8[4096]{0}', space=vmem, size = 0x1000, scoped, tag = 'output window, operand 0, single buffered']
    #allocation3 [shape = 's32[1]{0}', space=sflag, size = 0x4, scoped, tag = 'scoped memory for tpu_custom_call.1']
    %8 = vsyncpa [#allocation3], 0
    // Predicated region
    $region2: #{tpu_custom_call.1} parent=1 // pred_check
      _
    $region3: #{tpu_custom_call.1} parent=1 // pred_check_branch
      %10 = sbr.rel (0) target = $region5
    $region4: #{tpu_custom_call.1} parent=1 // pred_region
      _
    $region5: #{tpu_custom_call.1} parent=1 // pred_fallthru
      _
    // Predicated region
    $region6: #{tpu_custom_call.1} parent=1 // pred_check
      _
    $region7: #{tpu_custom_call.1} parent=1 // pred_check_branch
      %12 = sbr.rel (0) target = $region9
    $region8: #{tpu_custom_call.1} parent=1 // pred_region
      _
    $region9: #{tpu_custom_call.1} parent=1 // pred_fallthru
      _
    // Predicated region
    $region10: #{tpu_custom_call.1} parent=1 // pred_check
      _
    $region11: #{tpu_custom_call.1} parent=1 // pred_check_branch
      %14 = sbr.rel (0) target = $region13
    $region12: #{tpu_custom_call.1} parent=1 // pred_region
      _
    $region13: #{tpu_custom_call.1} parent=1 // pred_fallthru
      _
    %v16 = vld [vmem:[%s0] sm:$0xff]
    %v17 = vpack.c.bf16 %v16, %v16
    %v18 = vld [vmem:[%s1] sm:$0xf]
    %v19 = vld [vmem:[%s1 + $0x4] sm:$0xf]
    %v20 = vld [vmem:[%s1 + $0x8] sm:$0xf]
    %v21 = vld [vmem:[%s1 + $0xc] sm:$0xf]
    %v22 = vld [vmem:[%s1 + $0x10] sm:$0xf]
    %v23 = vld [vmem:[%s1 + $0x14] sm:$0xf]
    %v24 = vld [vmem:[%s2] sm:$0x1]
    %v26 = vperm.slane %v24, 0
    %v34 = vunpack.c.l.b16 %v18
    %v35 = vunpack.c.l.b16 %v19
    %v36 = vunpack.c.l.b16 %v20
    %v37 = vunpack.c.l.b16 %v21
    %v38 = vunpack.c.l.b16 %v22
    %v39 = vunpack.c.l.b16 %v23
    %v40 = vpack.c.b16 %v35, %v34
    %v41 = vpack.c.b16 %v37, %v36
    %v42 = vpack.c.b16 %v39, %v38
    %vm46 = vcmask 392192
    %v48 = vsel %vm46, %v17, 0
    %50 = vmatpush.bf16.msra.mxu0 0
    %51 = vmatpush.bf16.msra.mxu0 0
    %52 = vmatpush.bf16.msra.mxu0 0
    %53 = vmatpush.bf16.msra.mxu0 0
    %54 = vmatpush.bf16.msra.mxu0 0
    %55 = vmatpush.bf16.msra.mxu0 %v42
    %56 = vmatpush.bf16.msra.mxu0 %v41
    %57 = vmatpush.bf16.msra.mxu0 %v40
    %58 = vmatmul.bf16.gmra.mxu0 %v48
    %v59 = vpop.f32.mrf.mxu0
    %v60 = vadd.f32 %v26, %v59
    %v61 = vpop.f32.mrf.mxu0
    %62 = vdwg.mxu0
    %vm63 = vcmask 261120
    %64 = vst.msk [vmem:[#allocation2] sm:$0xff] %vm63, %v60
    // Predicated region
    $region14: #{tpu_custom_call.1} parent=1 // pred_check
      _
    $region15: #{tpu_custom_call.1} parent=1 // pred_check_branch
      %66 = sbr.rel (0) target = $region17
    $region16: #{tpu_custom_call.1} parent=1 // pred_region
      %68 = vsyncadd [#allocation3], 0
      %s70 = sshll.u32 [#allocation2], 4
      %s71 = int_to_ptr.vmem [resolvable:$true] %s70
      %s72 = sshll.u32 %s3, 4
      %s73 = int_to_ptr.hbm [resolvable:$true] %s72
      %75 = dma.vmem_to_hbm [thread:$0]  %s71, 128, %s73, [#allocation3]
    $region17: #{tpu_custom_call.1} parent=1 // pred_fallthru
      _
    // Predicated region
    $region18: #{tpu_custom_call.1} parent=1 // pred_check
      _
    $region19: #{tpu_custom_call.1} parent=1 // pred_check_branch
      %77 = sbr.rel (0) target = $region21
    $region20: #{tpu_custom_call.1} parent=1 // pred_region
      %79 = dma.done [#allocation3], 128
    $region21: #{tpu_custom_call.1} parent=1 // pred_fallthru
      _
    %80 = vsyncpa [#allocation3], 1

</llo_original>
